<compile_context>
chip_gen: v7x
topology: tpu7x:2x2x1
jax: 0.10.0
libtpu: 0.0.40
codegen_flags: <defaults>
</compile_context>

<pallas_src>
import jax
import jax.numpy as jnp
import numpy as np
from jax.experimental import pallas as pl
from jax.experimental.pallas import tpu as pltpu

# ----- problem sizes (small, consistent with the module's forward) -----
N, C_IN, H, W = 2, 4, 16, 16
C_HID = 32
N_CLS = 8
KH = KW = 3
HW = H * W
KC = KH * KW * C_IN  # 36


def encdec_kernel(p_ref, w3t_ref, w1t_ref, o_ref):
    # p_ref  : (KC+1, N*HW)    bf16  im2col patches + constant-1 row (bias input)
    # w3t_ref: (C_HID+1, KC+1) bf16  [encoder weight | b3]; extra row -> constant-1 feature
    # w1t_ref: (N_CLS, C_HID+1) bf16 [decoder weight | b1]
    # o_ref  : (N, N_CLS, HW)  f32   lane-dense output (reshaped to NCHW outside)

    # encoder: one (33,37)x(37,512) MXU matmul, bias already folded in
    feat = jnp.dot(w3t_ref[...], p_ref[...], preferred_element_type=jnp.float32)
    feat = jnp.maximum(feat, 0.0)                    # ReLU (constant row stays 1.0)

    # decoder: one (8,33)x(33,512) MXU matmul, bias folded via the constant row
    out = jnp.dot(w1t_ref[...], feat.astype(jnp.bfloat16),
                  preferred_element_type=jnp.float32)     # (N_CLS, N*HW)

    # split the 512-lane result into two 256-lane (128-aligned) unmasked stores
    o_ref[0] = out[:, :HW]
    o_ref[1] = out[:, HW:]


def encoder_decoder(x_nchw, w3, b3, w1, b1):
    """Forward pass: decoder(encoder(x)). Input NCHW, output NCHW."""
    # --- channels-major im2col, built directly from the NCHW input ---
    xp = jnp.pad(x_nchw, ((0, 0), (0, 0), (1, 1), (1, 1)))        # (N, Cin, H+2, W+2)
    xpt = jnp.transpose(xp, (1, 0, 2, 3))                         # (Cin, N, H+2, W+2), ~10 KB
    taps = [xpt[:, :, ky:ky + H, kx:kx + W]
            for ky in range(KH) for kx in range(KW)]              # 9 x (Cin, N, H, W)
    patches = jnp.stack(taps, axis=0).reshape(KC, N * HW)         # (36, 512), rows = (ky,kx,cin)
    ones_row = jnp.ones((1, N * HW), jnp.float32)
    p_aug = jnp.concatenate([patches, ones_row], axis=0)          # (37, 512)

    # --- augmented weights: biases folded into the matmuls ---
    w3t = w3.reshape(KC, C_HID).T                                 # (C_HID, 36)
    w3t_aug = jnp.zeros((C_HID + 1, KC + 1), jnp.float32)
    w3t_aug = w3t_aug.at[:C_HID, :KC].set(w3t)                    # weights
    w3t_aug = w3t_aug.at[:C_HID, KC].set(b3.reshape(C_HID))       # encoder bias column
    w3t_aug = w3t_aug.at[C_HID, KC].set(1.0)                      # constant-1 feature row
    w1t_aug = jnp.concatenate([w1.T, b1.reshape(N_CLS, 1)], 1)    # (N_CLS, C_HID+1)

    # bf16 MXU inputs; accumulation + ReLU stay f32 inside the kernel.
    p_aug = p_aug.astype(jnp.bfloat16)
    w3t_aug = w3t_aug.astype(jnp.bfloat16)
    w1t_aug = w1t_aug.astype(jnp.bfloat16)

    vmem = pl.BlockSpec(memory_space=pltpu.MemorySpace.VMEM)
    out_flat = pl.pallas_call(
        encdec_kernel,
        out_shape=jax.ShapeDtypeStruct((N, N_CLS, HW), jnp.float32),
        in_specs=[vmem, vmem, vmem],     # whole arrays resident in VMEM, no grid,
        out_specs=vmem,                  # no double-buffering scratch
    )(p_aug, w3t_aug, w1t_aug)

    # (N, N_CLS, H*W) -> (N, N_CLS, H, W): pure reshape, no transpose.
    return out_flat.reshape(N, N_CLS, H, W)


def reference(x_nchw, w3, b3, w1, b1):
    """Pure-JAX f32 reference (same math, via lax.conv) for verification."""
    x = jnp.transpose(x_nchw, (0, 2, 3, 1))
    y = jax.lax.conv_general_dilated(
        x, w3, window_strides=(1, 1), padding="SAME",
        dimension_numbers=("NHWC", "HWIO", "NHWC"))
    y = jnp.maximum(y + b3.reshape(1, 1, 1, C_HID), 0.0)
    y = jnp.einsum("nhwc,co->nhwo", y, w1) + b1.reshape(1, 1, 1, N_CLS)
    return jnp.transpose(y, (0, 3, 1, 2))


if __name__ == "__main__":
    key = jax.random.PRNGKey(0)
    kx, k1, k2, k3, k4 = jax.random.split(key, 5)

    # deterministic synthetic input (NCHW, like PyTorch) and parameters
    x = jax.random.normal(kx, (N, C_IN, H, W), jnp.float32)
    w3 = jax.random.normal(k1, (KH, KW, C_IN, C_HID), jnp.float32) * 0.1
    b3 = jax.random.normal(k2, (1, C_HID), jnp.float32) * 0.1
    w1 = jax.random.normal(k3, (C_HID, N_CLS), jnp.float32) * 0.1
    b1 = jax.random.normal(k4, (1, N_CLS), jnp.float32) * 0.1

    out = jax.block_until_ready(encoder_decoder(x, w3, b3, w1, b1))
    ref = jax.block_until_ready(reference(x, w3, b3, w1, b1))

    assert out.shape == (N, N_CLS, H, W)
    # bf16 matmul inputs (f32 accumulation) -> loosen tolerance vs. f32 ref.
    assert np.allclose(np.asarray(out), np.asarray(ref), atol=2e-2, rtol=2e-2)

    print("KERNEL_OK")
</pallas_src>

<mosaic_0001>
module attributes {stable_mosaic.version = 11 : i64} {
  func.func @encdec_kernel(%arg0: memref<37x512xbf16, #tpu.memory_space<vmem>>, %arg1: memref<33x37xbf16, #tpu.memory_space<vmem>>, %arg2: memref<8x33xbf16, #tpu.memory_space<vmem>>, %arg3: memref<2x8x256xf32, #tpu.memory_space<vmem>>) attributes {dimension_semantics = [], scalar_prefetch = 0 : i64, scratch_operands = 0 : i64, tpu.core_type = #tpu.core_type<tc>} {
    %c0 = arith.constant 0 : index
    %c0_0 = arith.constant 0 : index
    %0 = vector.load %arg1[%c0, %c0_0] : memref<33x37xbf16, #tpu.memory_space<vmem>>, vector<33x37xbf16>
    %c0_1 = arith.constant 0 : index
    %c0_2 = arith.constant 0 : index
    %1 = vector.load %arg0[%c0_1, %c0_2] : memref<37x512xbf16, #tpu.memory_space<vmem>>, vector<37x512xbf16>
    %cst = arith.constant dense<0.000000e+00> : vector<33x512xf32>
    %2 = tpu.matmul %0, %1, %cst {dimension_numbers = #tpu.dot_dimension_numbers<[1], [0], [0], [1], [0, 0, 1, 1], [], []>} : vector<33x37xbf16>, vector<37x512xbf16>, vector<33x512xf32> -> vector<33x512xf32>
    %cst_3 = arith.constant 0.000000e+00 : f32
    %3 = vector.broadcast %cst_3 : f32 to vector<33x512xf32>
    %4 = arith.maximumf %2, %3 : vector<33x512xf32>
    %c0_4 = arith.constant 0 : index
    %c0_5 = arith.constant 0 : index
    %5 = vector.load %arg2[%c0_4, %c0_5] : memref<8x33xbf16, #tpu.memory_space<vmem>>, vector<8x33xbf16>
    %6 = arith.truncf %4 : vector<33x512xf32> to vector<33x512xbf16>
    %cst_6 = arith.constant dense<0.000000e+00> : vector<8x512xf32>
    %7 = tpu.matmul %5, %6, %cst_6 {dimension_numbers = #tpu.dot_dimension_numbers<[1], [0], [0], [1], [0, 0, 1, 1], [], []>} : vector<8x33xbf16>, vector<33x512xbf16>, vector<8x512xf32> -> vector<8x512xf32>
    %8 = vector.extract_strided_slice %7 {offsets = [0, 0], sizes = [8, 256], strides = [1, 1]} : vector<8x512xf32> to vector<8x256xf32>
    %c0_7 = arith.constant 0 : index
    %c0_8 = arith.constant 0 : index
    %c0_9 = arith.constant 0 : index
    %9 = vector.load %arg3[%c0_7, %c0_8, %c0_9] : memref<2x8x256xf32, #tpu.memory_space<vmem>>, vector<1x8x256xf32>
    %10 = vector.shape_cast %9 : vector<1x8x256xf32> to vector<8x256xf32>
    %11 = vector.shape_cast %8 : vector<8x256xf32> to vector<1x8x256xf32>
    tpu.vector_store %arg3[%c0_7, %c0_8, %c0_9], %11 {strides = array<i32>} : memref<2x8x256xf32, #tpu.memory_space<vmem>>, vector<1x8x256xf32>,
    %12 = vector.extract_strided_slice %7 {offsets = [0, 256], sizes = [8, 256], strides = [1, 1]} : vector<8x512xf32> to vector<8x256xf32>
    %c1 = arith.constant 1 : index
    %c0_10 = arith.constant 0 : index
    %c0_11 = arith.constant 0 : index
    %13 = vector.load %arg3[%c1, %c0_10, %c0_11] : memref<2x8x256xf32, #tpu.memory_space<vmem>>, vector<1x8x256xf32>
    %14 = vector.shape_cast %13 : vector<1x8x256xf32> to vector<8x256xf32>
    %15 = vector.shape_cast %12 : vector<8x256xf32> to vector<1x8x256xf32>
    tpu.vector_store %arg3[%c1, %c0_10, %c0_11], %15 {strides = array<i32>} : memref<2x8x256xf32, #tpu.memory_space<vmem>>, vector<1x8x256xf32>,
    return
  }
}

</mosaic_0001>

<llo_original>
// kernel: tpu_custom_call.1
$region0: #{tpu_custom_call.1}
  #allocation0 [shape = 'u32[]', space=smem, size = 0x4, offset = 0x4, fixed_abs, tag = 'smem constant byte address 0x4 - core index']
  #allocation1 [shape = 'u32[144,128]{1,0:T(1,128)}', space=vmem, size = 0x12000, scoped, tag = 'internal scratch']
  %s0 = inlined_call_operand.hbm [shape: bf16[37,512], index: 0, kind: input, shape index: {}]
  %s1 = inlined_call_operand.hbm [shape: bf16[33,37], index: 1, kind: input, shape index: {}]
  %s2 = inlined_call_operand.vmem [shape: bf16[8,33], index: 2, kind: input, shape index: {}]
  %s3 = inlined_call_operand.hbm [shape: f32[2,8,256], index: 3, kind: output, shape index: {}]
  %s4 = sld [smem:[#allocation0]]
  $region30: #{tpu_custom_call.1} parent=0
    _
  %s6 = ssub.s32 1, %s4
  %s7 = scalar_select 0, %s6, %s4
  $region1: #{tpu_custom_call.1} parent=0
    #allocation2 [shape = 'u8[40960]{0}', space=vmem, size = 0xa000, scoped, tag = 'input window, operand 0, single buffered']
    #allocation3 [shape = 's32[1]{0}', space=sflag, size = 0x4, scoped, tag = 'scoped memory for tpu_custom_call.1']
    #allocation4 [shape = 's32[1]{0}', space=sflag, size = 0x4, scoped, tag = 'scoped memory for tpu_custom_call.1']
    #allocation5 [shape = 'u8[10240]{0}', space=vmem, size = 0x2800, scoped, tag = 'input window, operand 1, single buffered']
    #allocation6 [shape = 's32[1]{0}', space=sflag, size = 0x4, scoped, tag = 'scoped memory for tpu_custom_call.1']
    #allocation7 [shape = 'u8[16384]{0}', space=vmem, size = 0x4000, scoped, tag = 'output window, operand 0, single buffered']
    %8 = vsyncpa [#allocation3], 0
    %9 = vsyncpa [#allocation6], 0
    %10 = vsyncpa [#allocation4], 0
    // Predicated region
    $region2: #{tpu_custom_call.1} parent=1 // pred_check
      _
    $region3: #{tpu_custom_call.1} parent=1 // pred_check_branch
      %12 = sbr.rel (0) target = $region5
    $region4: #{tpu_custom_call.1} parent=1 // pred_region
      %s14 = ssub.s32 1280, 1280
      %15 = vsyncadd [#allocation3], %s14
      %s16 = sshll.u32 [#allocation2], 4
      %s17 = int_to_ptr.vmem [resolvable:$true] %s16
      %22 = dma.hbm_to_vmem [thread:$0]  %s0, 1280, %s17, [#allocation3], 256, 256, 16
    $region5: #{tpu_custom_call.1} parent=1 // pred_fallthru
      _
    // Predicated region
    $region6: #{tpu_custom_call.1} parent=1 // pred_check
      _
    $region7: #{tpu_custom_call.1} parent=1 // pred_check_branch
      %24 = sbr.rel (0) target = $region9
    $region8: #{tpu_custom_call.1} parent=1 // pred_region
      %s26 = ssub.s32 320, 320
      %27 = vsyncadd [#allocation6], %s26
      %s28 = sshll.u32 [#allocation5], 4
      %s29 = int_to_ptr.vmem [resolvable:$true] %s28
      %34 = dma.hbm_to_vmem [thread:$0]  %s1, 320, %s29, [#allocation6], 64, 64, 4
    $region9: #{tpu_custom_call.1} parent=1 // pred_fallthru
      _
    // Predicated region
    $region10: #{tpu_custom_call.1} parent=1 // pred_check
      _
    $region11: #{tpu_custom_call.1} parent=1 // pred_check_branch
      %36 = sbr.rel (0) target = $region13
    $region12: #{tpu_custom_call.1} parent=1 // pred_region
      _
    $region13: #{tpu_custom_call.1} parent=1 // pred_fallthru
      _
    // Predicated region
    $region14: #{tpu_custom_call.1} parent=1 // pred_check
      _
    $region15: #{tpu_custom_call.1} parent=1 // pred_check_branch
      %38 = sbr.rel (0) target = $region17
    $region16: #{tpu_custom_call.1} parent=1 // pred_region
      %39 = dma.done [#allocation3], 1280
    $region17: #{tpu_custom_call.1} parent=1 // pred_fallthru
      _
    // Predicated region
    $region18: #{tpu_custom_call.1} parent=1 // pred_check
      _
    $region19: #{tpu_custom_call.1} parent=1 // pred_check_branch
      %41 = sbr.rel (0) target = $region21
    $region20: #{tpu_custom_call.1} parent=1 // pred_region
      %42 = dma.done [#allocation6], 320
    $region21: #{tpu_custom_call.1} parent=1 // pred_fallthru
      _
    %v44 = vld [vmem:[#allocation5] sm:$0xf]
    %v45 = vld [vmem:[#allocation5 + $0x4] sm:$0xf]
    %v46 = vld [vmem:[#allocation5 + $0x8] sm:$0xf]
    %v47 = vld [vmem:[#allocation5 + $0xc] sm:$0xf]
    %v48 = vld [vmem:[#allocation5 + $0x10] sm:$0x1]
    %v49 = vld [vmem:[#allocation2] sm:$0xff]
    %v50 = vld [vmem:[#allocation2 + $0x8] sm:$0xff]
    %v51 = vld [vmem:[#allocation2 + $0x10] sm:$0xff]
    %v52 = vld [vmem:[#allocation2 + $0x18] sm:$0xff]
    %v53 = vld [vmem:[#allocation2 + $0x20] sm:$0xff]
    %v54 = vld [vmem:[#allocation2 + $0x28] sm:$0xff]
    %v55 = vld [vmem:[#allocation2 + $0x30] sm:$0xff]
    %v56 = vld [vmem:[#allocation2 + $0x38] sm:$0xff]
    %v57 = vld [vmem:[#allocation2 + $0x40] sm:$0x77]
    %v58 = vld [vmem:[#allocation2 + $0x48] sm:$0x77]
    %v64 = vunpack.c.l.b16 %v44
    %v65 = vunpack.c.l.b16 %v45
    %v66 = vunpack.c.l.b16 %v46
    %v67 = vunpack.c.l.b16 %v47
    %v68 = vunpack.c.l.b16 %v48
    %v69 = vpack.c.b16 %v65, %v64
    %v70 = vpack.c.b16 %v67, %v66
    %v71 = vpack.c.b16 %v68, %v68
    %v82 = vunpack.c.l.b16 %v49
    %v83 = vunpack.c.h.b16 %v49
    %v84 = vunpack.c.l.b16 %v50
    %v85 = vunpack.c.h.b16 %v50
    %v86 = vunpack.c.l.b16 %v51
    %v87 = vunpack.c.h.b16 %v51
    %v88 = vunpack.c.l.b16 %v52
    %v89 = vunpack.c.h.b16 %v52
    %v90 = vunpack.c.l.b16 %v53
    %v91 = vunpack.c.h.b16 %v53
    %v92 = vunpack.c.l.b16 %v54
    %v93 = vunpack.c.h.b16 %v54
    %v94 = vunpack.c.l.b16 %v55
    %v95 = vunpack.c.h.b16 %v55
    %v96 = vunpack.c.l.b16 %v56
    %v97 = vunpack.c.h.b16 %v56
    %v98 = vunpack.c.l.b16 %v57
    %v99 = vunpack.c.h.b16 %v57
    %v100 = vunpack.c.l.b16 %v58
    %v101 = vunpack.c.h.b16 %v58
    %v102 = vpack.c.b16 %v86, %v82
    %v103 = vpack.c.b16 %v87, %v83
    %v104 = vpack.c.b16 %v88, %v84
    %v105 = vpack.c.b16 %v89, %v85
    %v106 = vpack.c.b16 %v94, %v90
    %v107 = vpack.c.b16 %v95, %v91
    %v108 = vpack.c.b16 %v96, %v92
    %v109 = vpack.c.b16 %v97, %v93
    %v110 = vpack.c.b16 %v98, %v98
    %v111 = vpack.c.b16 %v99, %v99
    %v112 = vpack.c.b16 %v100, %v100
    %v113 = vpack.c.b16 %v101, %v101
    %vm122 = vcmask 302080
    %v124 = vsel %vm122, %v69, 0
    %v127 = vsel %vm122, %v70, 0
    %v130 = vsel %vm122, %v71, 0
    %vm132 = vcmask 1041408
    %vm133 = vcmask 1042432
    %v134 = vsel %vm132, 4294967295, 65535
    %v135 = vsel %vm133, %v134, 0
    %v137 = vand.u32 %v110, %v135
    %v140 = vand.u32 %v111, %v135
    %v143 = vand.u32 %v112, %v135
    %v146 = vand.u32 %v113, %v135
    %148 = vmatprep.subr.bf16.mxu0 %v103
    %149 = vmatpush1.bf16.msra.mxu0 %v102
    %150 = vmatprep.subr.bf16.mxu0 %v107
    %151 = vmatpush1.bf16.msra.mxu0 %v106
    %152 = vmatprep.subr.bf16.mxu0 %v140
    %153 = vmatpush1.bf16.msra.mxu0 %v137
    %154 = vmatprep.subr.bf16.mxu0 0
    %155 = vmatpush1.bf16.msra.mxu0 0
    %156 = vmatprep.subr.bf16.mxu0 0
    %157 = vmatpush1.bf16.msra.mxu0 0
    %158 = vmatprep.subr.bf16.mxu0 0
    %159 = vmatpush1.bf16.msra.mxu0 0
    %160 = vmatprep.subr.bf16.mxu0 0
    %161 = vmatpush1.bf16.msra.mxu0 0
    %162 = vmatprep.subr.bf16.mxu0 0
    %163 = vmatpush1.bf16.msra.mxu0 0
    %164 = vmatprep.subr.bf16.mxu0 0
    %165 = vmatpush1.bf16.msra.mxu0 0
    %166 = vmatprep.subr.bf16.mxu0 0
    %167 = vmatpush1.bf16.msra.mxu0 0
    %168 = vmatprep.subr.bf16.mxu0 0
    %169 = vmatpush1.bf16.msra.mxu0 0
    %170 = vmatprep.subr.bf16.mxu0 0
    %171 = vmatpush1.bf16.msra.mxu0 0
    %172 = vmatprep.subr.bf16.mxu0 0
    %173 = vmatpush1.bf16.msra.mxu0 0
    %174 = vmatprep.subr.bf16.mxu0 0
    %175 = vmatpush1.bf16.msra.mxu0 0
    %176 = vmatprep.subr.bf16.mxu0 0
    %177 = vmatpush1.bf16.msra.mxu0 0
    %178 = vmatprep.subr.bf16.mxu0 0
    %179 = vmatpush1.bf16.msra.mxu0 0
    %180 = vmatprep.mubr.bf16.mxu0 0
    %181 = vmatmul.mubr.bf16.gmra.mrb[0].mxu0 %v124
    %v182 = vpop.f32.mrb[0].mxu0
    %v183 = vadd.f32 0.0, %v182
    %v184 = vpop.f32.mrb[0].mxu0
    %v185 = vadd.f32 0.0, %v184
    %v186 = vpop.f32.mrb[0].mxu0
    %v187 = vadd.f32 0.0, %v186
    %v188 = vpop.f32.mrb[0].mxu0
    %v189 = vadd.f32 0.0, %v188
    %190 = vmatprep.mubr.bf16.mxu0 0
    %191 = vmatmul.mubr.bf16.gmra.mrb[0].mxu0 %v127
    %v192 = vpop.f32.mrb[0].mxu0
    %v193 = vadd.f32 0.0, %v192
    %v194 = vpop.f32.mrb[0].mxu0
    %v195 = vadd.f32 0.0, %v194
    %v196 = vpop.f32.mrb[0].mxu0
    %v197 = vadd.f32 0.0, %v196
    %v198 = vpop.f32.mrb[0].mxu0
    %v199 = vadd.f32 0.0, %v198
    %200 = vmatprep.mubr.bf16.mxu0 0
    %201 = vmatmul.mubr.bf16.gmra.mrb[0].mxu0 %v130
    %v202 = vpop.f32.mrb[0].mxu0
    %v203 = vadd.f32 0.0, %v202
    %v204 = vpop.f32.mrb[0].mxu0
    %v205 = vadd.f32 0.0, %v204
    %v206 = vpop.f32.mrb[0].mxu0
    %v207 = vpop.f32.mrb[0].mxu0
    %208 = vdwg.mxu0
    %209 = vmatprep.subr.bf16.mxu0 %v105
    %210 = vmatpush1.bf16.msra.mxu0 %v104
    %211 = vmatprep.subr.bf16.mxu0 %v109
    %212 = vmatpush1.bf16.msra.mxu0 %v108
    %213 = vmatprep.subr.bf16.mxu0 %v146
    %214 = vmatpush1.bf16.msra.mxu0 %v143
    %215 = vmatprep.subr.bf16.mxu0 0
    %216 = vmatpush1.bf16.msra.mxu0 0
    %217 = vmatprep.subr.bf16.mxu0 0
    %218 = vmatpush1.bf16.msra.mxu0 0
    %219 = vmatprep.subr.bf16.mxu0 0
    %220 = vmatpush1.bf16.msra.mxu0 0
    %221 = vmatprep.subr.bf16.mxu0 0
    %222 = vmatpush1.bf16.msra.mxu0 0
    %223 = vmatprep.subr.bf16.mxu0 0
    %224 = vmatpush1.bf16.msra.mxu0 0
    %225 = vmatprep.subr.bf16.mxu0 0
    %226 = vmatpush1.bf16.msra.mxu0 0
    %227 = vmatprep.subr.bf16.mxu0 0
    %228 = vmatpush1.bf16.msra.mxu0 0
    %229 = vmatprep.subr.bf16.mxu0 0
    %230 = vmatpush1.bf16.msra.mxu0 0
    %231 = vmatprep.subr.bf16.mxu0 0
    %232 = vmatpush1.bf16.msra.mxu0 0
    %233 = vmatprep.subr.bf16.mxu0 0
    %234 = vmatpush1.bf16.msra.mxu0 0
    %235 = vmatprep.subr.bf16.mxu0 0
    %236 = vmatpush1.bf16.msra.mxu0 0
    %237 = vmatprep.subr.bf16.mxu0 0
    %238 = vmatpush1.bf16.msra.mxu0 0
    %239 = vmatprep.subr.bf16.mxu0 0
    %240 = vmatpush1.bf16.msra.mxu0 0
    %241 = vmatprep.mubr.bf16.mxu0 0
    %242 = vmatmul.mubr.bf16.gmra.mrb[0].mxu0 %v124
    %v243 = vpop.f32.mrb[0].mxu0
    %v244 = vadd.f32 0.0, %v243
    %v245 = vpop.f32.mrb[0].mxu0
    %v246 = vadd.f32 0.0, %v245
    %v247 = vpop.f32.mrb[0].mxu0
    %v248 = vadd.f32 0.0, %v247
    %v249 = vpop.f32.mrb[0].mxu0
    %v250 = vadd.f32 0.0, %v249
    %251 = vmatprep.mubr.bf16.mxu0 0
    %252 = vmatmul.mubr.bf16.gmra.mrb[0].mxu0 %v127
    %v253 = vpop.f32.mrb[0].mxu0
    %v254 = vadd.f32 0.0, %v253
    %v255 = vpop.f32.mrb[0].mxu0
    %v256 = vadd.f32 0.0, %v255
    %v257 = vpop.f32.mrb[0].mxu0
    %v258 = vadd.f32 0.0, %v257
    %v259 = vpop.f32.mrb[0].mxu0
    %v260 = vadd.f32 0.0, %v259
    %261 = vmatprep.mubr.bf16.mxu0 0
    %262 = vmatmul.mubr.bf16.gmra.mrb[0].mxu0 %v130
    %v263 = vpop.f32.mrb[0].mxu0
    %v264 = vadd.f32 0.0, %v263
    %v265 = vpop.f32.mrb[0].mxu0
    %v266 = vadd.f32 0.0, %v265
    %v267 = vpop.f32.mrb[0].mxu0
    %v268 = vpop.f32.mrb[0].mxu0
    %269 = vdwg.mxu0
    %v270 = vmax.f32 %v183, 0.0
    %v271 = vmax.f32 %v185, 0.0
    %v272 = vmax.f32 %v244, 0.0
    %v273 = vmax.f32 %v246, 0.0
    %v274 = vmax.f32 %v187, 0.0
    %v275 = vmax.f32 %v189, 0.0
    %v276 = vmax.f32 %v248, 0.0
    %v277 = vmax.f32 %v250, 0.0
    %v278 = vmax.f32 %v193, 0.0
    %v279 = vmax.f32 %v195, 0.0
    %v280 = vmax.f32 %v254, 0.0
    %v281 = vmax.f32 %v256, 0.0
    %v282 = vmax.f32 %v197, 0.0
    %v283 = vmax.f32 %v199, 0.0
    %v284 = vmax.f32 %v258, 0.0
    %v285 = vmax.f32 %v260, 0.0
    %v286 = vmax.f32 %v203, 0.0
    %v287 = vmax.f32 %v205, 0.0
    %v288 = vmax.f32 %v264, 0.0
    %v289 = vmax.f32 %v266, 0.0
    %v290 = vld [vmem:[%s2] sm:$0xf]
    %v291 = vpack.c.bf16 %v274, %v270
    %v292 = vpack.c.bf16 %v275, %v271
    %v293 = vpack.c.bf16 %v276, %v272
    %v294 = vpack.c.bf16 %v277, %v273
    %v295 = vpack.c.bf16 %v282, %v278
    %v296 = vpack.c.bf16 %v283, %v279
    %v297 = vpack.c.bf16 %v284, %v280
    %v298 = vpack.c.bf16 %v285, %v281
    %v299 = vpack.c.bf16 %v286, %v286
    %v300 = vpack.c.bf16 %v287, %v287
    %v301 = vpack.c.bf16 %v288, %v288
    %v302 = vpack.c.bf16 %v289, %v289
    %vm303 = vcmask 269312
    %v305 = vsel %vm303, %v290, 0
    %vm307 = vcmask 1040384
    %v308 = vsel 0, 4294967295, 65535
    %v309 = vsel %vm307, %v308, 0
    %v311 = vand.u32 %v299, %v309
    %v314 = vand.u32 %v300, %v309
    %v317 = vand.u32 %v301, %v309
    %v320 = vand.u32 %v302, %v309
    %322 = vmatprep.subr.bf16.mxu0 %v292
    %323 = vmatpush1.bf16.msra.mxu0 %v291
    %324 = vmatprep.subr.bf16.mxu0 %v296
    %325 = vmatpush1.bf16.msra.mxu0 %v295
    %326 = vmatprep.subr.bf16.mxu0 %v314
    %327 = vmatpush1.bf16.msra.mxu0 %v311
    %328 = vmatprep.subr.bf16.mxu0 0
    %329 = vmatpush1.bf16.msra.mxu0 0
    %330 = vmatprep.subr.bf16.mxu0 0
    %331 = vmatpush1.bf16.msra.mxu0 0
    %332 = vmatprep.subr.bf16.mxu0 0
    %333 = vmatpush1.bf16.msra.mxu0 0
    %334 = vmatprep.subr.bf16.mxu0 0
    %335 = vmatpush1.bf16.msra.mxu0 0
    %336 = vmatprep.subr.bf16.mxu0 0
    %337 = vmatpush1.bf16.msra.mxu0 0
    %338 = vmatprep.subr.bf16.mxu0 0
    %339 = vmatpush1.bf16.msra.mxu0 0
    %340 = vmatprep.subr.bf16.mxu0 0
    %341 = vmatpush1.bf16.msra.mxu0 0
    %342 = vmatprep.subr.bf16.mxu0 0
    %343 = vmatpush1.bf16.msra.mxu0 0
    %344 = vmatprep.subr.bf16.mxu0 0
    %345 = vmatpush1.bf16.msra.mxu0 0
    %346 = vmatprep.subr.bf16.mxu0 0
    %347 = vmatpush1.bf16.msra.mxu0 0
    %348 = vmatprep.subr.bf16.mxu0 0
    %349 = vmatpush1.bf16.msra.mxu0 0
    %350 = vmatprep.subr.bf16.mxu0 0
    %351 = vmatpush1.bf16.msra.mxu0 0
    %352 = vmatprep.subr.bf16.mxu0 0
    %353 = vmatpush1.bf16.msra.mxu0 0
    %354 = vmatprep.mubr.bf16.mxu0 0
    %355 = vmatmul.mubr.bf16.gmra.mrb[0].mxu0 %v305
    %v356 = vpop.f32.mrb[0].mxu0
    %v357 = vadd.f32 0.0, %v356
    %v358 = vpop.f32.mrb[0].mxu0
    %v359 = vadd.f32 0.0, %v358
    %v360 = vpop.f32.mrb[0].mxu0
    %v361 = vpop.f32.mrb[0].mxu0
    %362 = vdwg.mxu0
    %363 = vmatprep.subr.bf16.mxu0 %v294
    %364 = vmatpush1.bf16.msra.mxu0 %v293
    %365 = vmatprep.subr.bf16.mxu0 %v298
    %366 = vmatpush1.bf16.msra.mxu0 %v297
    %367 = vmatprep.subr.bf16.mxu0 %v320
    %368 = vmatpush1.bf16.msra.mxu0 %v317
    %369 = vmatprep.subr.bf16.mxu0 0
    %370 = vmatpush1.bf16.msra.mxu0 0
    %371 = vmatprep.subr.bf16.mxu0 0
    %372 = vmatpush1.bf16.msra.mxu0 0
    %373 = vmatprep.subr.bf16.mxu0 0
    %374 = vmatpush1.bf16.msra.mxu0 0
    %375 = vmatprep.subr.bf16.mxu0 0
    %376 = vmatpush1.bf16.msra.mxu0 0
    %377 = vmatprep.subr.bf16.mxu0 0
    %378 = vmatpush1.bf16.msra.mxu0 0
    %379 = vmatprep.subr.bf16.mxu0 0
    %380 = vmatpush1.bf16.msra.mxu0 0
    %381 = vmatprep.subr.bf16.mxu0 0
    %382 = vmatpush1.bf16.msra.mxu0 0
    %383 = vmatprep.subr.bf16.mxu0 0
    %384 = vmatpush1.bf16.msra.mxu0 0
    %385 = vmatprep.subr.bf16.mxu0 0
    %386 = vmatpush1.bf16.msra.mxu0 0
    %387 = vmatprep.subr.bf16.mxu0 0
    %388 = vmatpush1.bf16.msra.mxu0 0
    %389 = vmatprep.subr.bf16.mxu0 0
    %390 = vmatpush1.bf16.msra.mxu0 0
    %391 = vmatprep.subr.bf16.mxu0 0
    %392 = vmatpush1.bf16.msra.mxu0 0
    %393 = vmatprep.subr.bf16.mxu0 0
    %394 = vmatpush1.bf16.msra.mxu0 0
    %395 = vmatprep.mubr.bf16.mxu0 0
    %396 = vmatmul.mubr.bf16.gmra.mrb[0].mxu0 %v305
    %v397 = vpop.f32.mrb[0].mxu0
    %v398 = vadd.f32 0.0, %v397
    %v399 = vpop.f32.mrb[0].mxu0
    %v400 = vadd.f32 0.0, %v399
    %v401 = vpop.f32.mrb[0].mxu0
    %v402 = vpop.f32.mrb[0].mxu0
    %403 = vdwg.mxu0
    %404 = vst [vmem:[#allocation7] sm:$0xff] %v357
    %405 = vst [vmem:[#allocation7 + $0x8] sm:$0xff] %v359
    %s406 = scalar_lea.vmem [#allocation7], 16
    %407 = vst [vmem:[%s406] sm:$0xff] %v398
    %408 = vst [vmem:[%s406 + $0x8] sm:$0xff] %v400
    // Predicated region
    $region22: #{tpu_custom_call.1} parent=1 // pred_check
      _
    $region23: #{tpu_custom_call.1} parent=1 // pred_check_branch
      %410 = sbr.rel (0) target = $region25
    $region24: #{tpu_custom_call.1} parent=1 // pred_region
      %s412 = ssub.s32 512, 512
      %413 = vsyncadd [#allocation4], %s412
      %s414 = sshll.u32 [#allocation7], 4
      %s415 = int_to_ptr.vmem [resolvable:$true] %s414
      %420 = dma.vmem_to_hbm [thread:$0]  %s415, 512, %s3, [#allocation4], 256, 256, 16
    $region25: #{tpu_custom_call.1} parent=1 // pred_fallthru
      _
    // Predicated region
    $region26: #{tpu_custom_call.1} parent=1 // pred_check
      _
    $region27: #{tpu_custom_call.1} parent=1 // pred_check_branch
      %422 = sbr.rel (0) target = $region29
    $region28: #{tpu_custom_call.1} parent=1 // pred_region
      %423 = dma.done [#allocation4], 512
    $region29: #{tpu_custom_call.1} parent=1 // pred_fallthru
      _
    %424 = vsyncpa [#allocation3], 1
    %425 = vsyncpa [#allocation6], 1
    %426 = vsyncpa [#allocation4], 1

</llo_original>
